<compile_context>
chip_gen: v7x
topology: tpu7x:2x2x1
jax: 0.10.0
libtpu: 0.0.40
codegen_flags: <defaults>
</compile_context>

<pallas_src>
import jax
import jax.numpy as jnp
from jax.experimental import pallas as pl
from jax.experimental.pallas import tpu as pltpu


_LANES = 128
_SUBLANES = 8
_MAX_TILE_ROWS = 2048   # 2048 rows * 128 lanes * 3 ch * 4 B = 3 MiB f32 per x block


def _make_sa_loss_kernel(hw, tile_rows, n_tiles_ps, need_mask):
    """Build the kernel with static shape/mask info baked in via closure."""

    def kernel(mean_ref, x_ref, o_ref):
        # mean_ref : SMEM (B, 3) f32     per-batch channel means (scalar prefetch)
        # x_ref    : VMEM (1, 3, tile_rows, 128)   one spatial tile, native dtype
        # o_ref    : VMEM (1, 8, 128) f32          per-(batch, split) accumulator
        b = pl.program_id(0)
        s = pl.program_id(1)
        t = pl.program_id(2)

        @pl.when(t == 0)
        def _():
            o_ref[...] = jnp.zeros_like(o_ref)

        m_r = mean_ref[b, 0]
        m_g = mean_ref[b, 1]
        m_b = mean_ref[b, 2]

        d_r = x_ref[0, 0].astype(jnp.float32) - m_r          # (tile_rows, 128)
        d_g = x_ref[0, 1].astype(jnp.float32) - m_g
        d_b = x_ref[0, 2].astype(jnp.float32) - m_b

        k = jnp.sqrt(d_r * d_r + d_g * d_g + d_b * d_b)      # (tile_rows, 128)

        if need_mask:
            # Zero out padded / over-scanned positions (pos >= H*W contributes 0).
            g_tile = s * n_tiles_ps + t                       # unclamped global tile
            row_ids = jax.lax.broadcasted_iota(jnp.int32, (tile_rows, _LANES), 0)
            lane_ids = jax.lax.broadcasted_iota(jnp.int32, (tile_rows, _LANES), 1)
            pos = (g_tile * tile_rows + row_ids) * _LANES + lane_ids
            k = jnp.where(pos < hw, k, 0.0)

        # Fold tile_rows into the (8, 128) accumulator: vreg-aligned reshape,
        # pure VPU adds, no cross-lane reduce per step.
        o_ref[0] += k.reshape(tile_rows // _SUBLANES, _SUBLANES, _LANES).sum(axis=0)

    return kernel


def sa_loss(x):
    """x: (B, 3, H, W), any float dtype. Returns scalar float32 loss."""
    B, C, H, W = x.shape
    assert C == 3, "Sa_Loss expects 3 channels (r, g, b)"
    hw = H * W

    # Per-batch per-channel spatial mean with f32 accumulation (== torch.mean(x,[2,3])).
    means = jnp.mean(x, axis=(2, 3), dtype=jnp.float32)                  # (B, 3)

    # --- layout plumbing (plain JAX, native dtype, at most a tiny zero pad) ---
    hw_pad = pl.cdiv(hw, _SUBLANES * _LANES) * _SUBLANES * _LANES
    x_flat = x.reshape(B, C, hw)
    if hw_pad != hw:
        # <= 8*128 - 1 zeros per (b, c); padded positions are masked in-kernel.
        x_flat = jnp.pad(x_flat, ((0, 0), (0, 0), (0, hw_pad - hw)))
    n_rows = hw_pad // _LANES                     # multiple of 8
    x_tiled = x_flat.reshape(B, C, n_rows, _LANES)

    tile_rows = min(_MAX_TILE_ROWS, n_rows)       # multiple of 8 by construction
    n_tiles = pl.cdiv(n_rows, tile_rows)

    # Engage both v7x TensorCores when B == 1 by splitting the tile axis.
    split = 2 if B == 1 else 1
    n_tiles_ps = pl.cdiv(n_tiles, split)

    need_mask = (split * n_tiles_ps * tile_rows * _LANES != hw)

    kernel = _make_sa_loss_kernel(hw, tile_rows, n_tiles_ps, need_mask)

    def x_index(b, s, t, mean_ref):
        g = s * n_tiles_ps + t
        g = jnp.minimum(g, n_tiles - 1)           # over-scanned tiles read a valid
        return (b, 0, g, 0)                       # block; the kernel masks them to 0

    def o_index(b, s, t, mean_ref):
        return (b * split + s, 0, 0)

    psums = pl.pallas_call(
        kernel,
        out_shape=jax.ShapeDtypeStruct((B * split, _SUBLANES, _LANES), jnp.float32),
        grid_spec=pltpu.PrefetchScalarGridSpec(
            num_scalar_prefetch=1,                # means -> SMEM
            grid=(B, split, n_tiles_ps),
            in_specs=[
                pl.BlockSpec((1, C, tile_rows, _LANES), x_index),
            ],
            out_specs=pl.BlockSpec((1, _SUBLANES, _LANES), o_index),
        ),
        compiler_params=pltpu.CompilerParams(
            dimension_semantics=("parallel", "parallel", "arbitrary"),
            vmem_limit_bytes=48 * 1024 * 1024,    # safe on v5e/v6e (128 MiB) and v7x (64 MiB)
        ),
    )(means, x_tiled)

    # Reference takes mean over (B, 1, H, W) -> divide by B*H*W (masked tail adds 0).
    return (jnp.sum(psums) / jnp.float32(B * hw)).astype(jnp.float32)


def _sa_loss_ref(x):
    """Plain-JAX reference matching the PyTorch forward."""
    xf = x.astype(jnp.float32)
    mean_rgb = jnp.mean(xf, axis=(2, 3), keepdims=True)
    d = xf - mean_rgb
    k = jnp.sqrt(jnp.sum(d * d, axis=1, keepdims=True))
    return jnp.mean(k)


if __name__ == "__main__":
    key = jax.random.PRNGKey(0)
    B, C, H, W = 2, 3, 16, 16
    x = jax.random.uniform(key, (B, C, H, W), dtype=jnp.float32)

    out = sa_loss(x)
    out = jax.block_until_ready(out)

    ref = _sa_loss_ref(x)
    assert jnp.allclose(out, ref, rtol=1e-5, atol=1e-5), (out, ref)

    print("KERNEL_OK")
</pallas_src>

<mosaic_0001>
module attributes {stable_mosaic.version = 11 : i64} {
  func.func @kernel(%arg0: i32, %arg1: i32, %arg2: i32, %arg3: memref<2x3xf32, #tpu.memory_space<smem>>, %arg4: memref<1x3x8x128xf32, #tpu.memory_space<vmem>>, %arg5: memref<1x8x128xf32, #tpu.memory_space<vmem>>) attributes {dimension_semantics = [#tpu.dimension_semantics<parallel>, #tpu.dimension_semantics<parallel>, #tpu.dimension_semantics<arbitrary>], iteration_bounds = array<i64: 2, 1, 1>, scalar_prefetch = 1 : i64, scratch_operands = 0 : i64, tpu.core_type = #tpu.core_type<tc>, window_params = [{transform_indices = @transform_0, window_bounds = array<i64: 1, 3, 8, 128>}, {transform_indices = @transform_1, window_bounds = array<i64: 1, 8, 128>}]} {
    %c0_i32 = arith.constant 0 : i32
    %0 = arith.cmpi eq, %arg2, %c0_i32 : i32
    %1 = arith.extui %0 : i1 to i32
    %c0_i32_0 = arith.constant 0 : i32
    %2 = arith.cmpi ne, %1, %c0_i32_0 : i32
    scf.if %2 {
      %cst_20 = arith.constant 0.000000e+00 : f32
      %49 = vector.broadcast %cst_20 : f32 to vector<1x8x128xf32>
      %c0_21 = arith.constant 0 : index
      %c0_22 = arith.constant 0 : index
      %c0_23 = arith.constant 0 : index
      %50 = vector.load %arg5[%c0_21, %c0_22, %c0_23] : memref<1x8x128xf32, #tpu.memory_space<vmem>>, vector<1x8x128xf32>
      tpu.vector_store %arg5[%c0_21, %c0_22, %c0_23], %49 {strides = array<i32>} : memref<1x8x128xf32, #tpu.memory_space<vmem>>, vector<1x8x128xf32>,
    } else {
    }
    %3 = arith.index_cast %arg0 : i32 to index
    %c0 = arith.constant 0 : index
    %4 = memref.load %arg3[%3, %c0] : memref<2x3xf32, #tpu.memory_space<smem>>
    %5 = arith.index_cast %arg0 : i32 to index
    %c1 = arith.constant 1 : index
    %6 = memref.load %arg3[%5, %c1] : memref<2x3xf32, #tpu.memory_space<smem>>
    %7 = arith.index_cast %arg0 : i32 to index
    %c2 = arith.constant 2 : index
    %8 = memref.load %arg3[%7, %c2] : memref<2x3xf32, #tpu.memory_space<smem>>
    %c0_1 = arith.constant 0 : index
    %c0_2 = arith.constant 0 : index
    %c0_3 = arith.constant 0 : index
    %c0_4 = arith.constant 0 : index
    %9 = vector.load %arg4[%c0_1, %c0_2, %c0_3, %c0_4] : memref<1x3x8x128xf32, #tpu.memory_space<vmem>>, vector<1x1x8x128xf32>
    %10 = vector.shape_cast %9 : vector<1x1x8x128xf32> to vector<8x128xf32>
    %11 = vector.broadcast %4 : f32 to vector<8x128xf32>
    %12 = arith.subf %10, %11 : vector<8x128xf32>
    %c0_5 = arith.constant 0 : index
    %c1_6 = arith.constant 1 : index
    %c0_7 = arith.constant 0 : index
    %c0_8 = arith.constant 0 : index
    %13 = vector.load %arg4[%c0_5, %c1_6, %c0_7, %c0_8] : memref<1x3x8x128xf32, #tpu.memory_space<vmem>>, vector<1x1x8x128xf32>
    %14 = vector.shape_cast %13 : vector<1x1x8x128xf32> to vector<8x128xf32>
    %15 = vector.broadcast %6 : f32 to vector<8x128xf32>
    %16 = arith.subf %14, %15 : vector<8x128xf32>
    %c0_9 = arith.constant 0 : index
    %c2_10 = arith.constant 2 : index
    %c0_11 = arith.constant 0 : index
    %c0_12 = arith.constant 0 : index
    %17 = vector.load %arg4[%c0_9, %c2_10, %c0_11, %c0_12] : memref<1x3x8x128xf32, #tpu.memory_space<vmem>>, vector<1x1x8x128xf32>
    %18 = vector.shape_cast %17 : vector<1x1x8x128xf32> to vector<8x128xf32>
    %19 = vector.broadcast %8 : f32 to vector<8x128xf32>
    %20 = arith.subf %18, %19 : vector<8x128xf32>
    %21 = arith.mulf %12, %12 : vector<8x128xf32>
    %22 = arith.mulf %16, %16 : vector<8x128xf32>
    %23 = arith.addf %21, %22 : vector<8x128xf32>
    %24 = arith.mulf %20, %20 : vector<8x128xf32>
    %25 = arith.addf %23, %24 : vector<8x128xf32>
    %26 = math.sqrt %25 : vector<8x128xf32>
    %c1_i32 = arith.constant 1 : i32
    %27 = arith.muli %arg1, %c1_i32 : i32
    %28 = arith.addi %27, %arg2 : i32
    %29 = tpu.iota {dimensions = array<i32: 0>} : vector<8x128xi32>
    %30 = tpu.iota {dimensions = array<i32: 1>} : vector<8x128xi32>
    %c8_i32 = arith.constant 8 : i32
    %31 = arith.muli %28, %c8_i32 : i32
    %32 = vector.broadcast %31 : i32 to vector<8x128xi32>
    %33 = arith.addi %32, %29 : vector<8x128xi32>
    %c128_i32 = arith.constant 128 : i32
    %34 = vector.broadcast %c128_i32 : i32 to vector<8x128xi32>
    %35 = arith.muli %33, %34 : vector<8x128xi32>
    %36 = arith.addi %35, %30 : vector<8x128xi32>
    %c256_i32 = arith.constant 256 : i32
    %37 = vector.broadcast %c256_i32 : i32 to vector<8x128xi32>
    %38 = arith.cmpi slt, %36, %37 : vector<8x128xi32>
    %cst = arith.constant 0.000000e+00 : f32
    %39 = vector.broadcast %cst : f32 to vector<8x128xf32>
    %40 = arith.select %38, %26, %39 : vector<8x128xi1>, vector<8x128xf32>
    %c0_13 = arith.constant 0 : index
    %c0_14 = arith.constant 0 : index
    %c0_15 = arith.constant 0 : index
    %41 = vector.load %arg5[%c0_13, %c0_14, %c0_15] : memref<1x8x128xf32, #tpu.memory_space<vmem>>, vector<1x8x128xf32>
    %42 = vector.shape_cast %41 : vector<1x8x128xf32> to vector<8x128xf32>
    %43 = vector.shape_cast %40 : vector<8x128xf32> to vector<1x8x128xf32>
    %cst_16 = arith.constant dense<0.000000e+00> : vector<8x128xf32>
    %44 = vector.multi_reduction <add>, %43, %cst_16 [0] : vector<1x8x128xf32> to vector<8x128xf32>
    %45 = arith.addf %42, %44 : vector<8x128xf32>
    %c0_17 = arith.constant 0 : index
    %c0_18 = arith.constant 0 : index
    %c0_19 = arith.constant 0 : index
    %46 = vector.load %arg5[%c0_17, %c0_18, %c0_19] : memref<1x8x128xf32, #tpu.memory_space<vmem>>, vector<1x8x128xf32>
    %47 = vector.shape_cast %46 : vector<1x8x128xf32> to vector<8x128xf32>
    %48 = vector.shape_cast %45 : vector<8x128xf32> to vector<1x8x128xf32>
    tpu.vector_store %arg5[%c0_17, %c0_18, %c0_19], %48 {strides = array<i32>} : memref<1x8x128xf32, #tpu.memory_space<vmem>>, vector<1x8x128xf32>,
    return
  }
  func.func @transform_0(%arg0: i32, %arg1: i32, %arg2: i32, %arg3: memref<2x3xf32, #tpu.memory_space<smem>>) -> (i32, i32, i32, i32) {
    %c1_i32 = arith.constant 1 : i32
    %0 = arith.muli %arg1, %c1_i32 : i32
    %1 = arith.addi %0, %arg2 : i32
    %c0_i32 = arith.constant 0 : i32
    %2 = arith.minsi %1, %c0_i32 : i32
    %c0_i32_0 = arith.constant 0 : i32
    %c0_i32_1 = arith.constant 0 : i32
    %c0_i32_2 = arith.constant 0 : i32
    return %arg0, %c0_i32_0, %2, %c0_i32_1 : i32, i32, i32, i32
  }
  func.func @transform_1(%arg0: i32, %arg1: i32, %arg2: i32, %arg3: memref<2x3xf32, #tpu.memory_space<smem>>) -> (i32, i32, i32) {
    %c1_i32 = arith.constant 1 : i32
    %0 = arith.muli %arg0, %c1_i32 : i32
    %1 = arith.addi %0, %arg1 : i32
    %c0_i32 = arith.constant 0 : i32
    %c0_i32_0 = arith.constant 0 : i32
    %c0_i32_1 = arith.constant 0 : i32
    return %1, %c0_i32, %c0_i32_0 : i32, i32, i32
  }
}

</mosaic_0001>

<llo_original>
// kernel: tpu_custom_call.1
$region0: #{tpu_custom_call.1}
  #allocation0 [shape = 'u32[]', space=smem, size = 0x4, offset = 0x4, fixed_abs, tag = 'smem constant byte address 0x4 - core index']
  #allocation1 [shape = 'u32[144,128]{1,0:T(1,128)}', space=vmem, size = 0x12000, scoped, tag = 'internal scratch']
  #allocation2 [shape = 's32[1]{0}', space=sflag, size = 0x4, scoped, tag = 'scoped memory for tpu_custom_call.1']
  #allocation3 [shape = 'u8[1024]{0}', space=smem, size = 0x400, scoped, tag = 'prefetched SMEM operand 0']
  %s0 = inlined_call_operand.hbm [shape: f32[2,3], index: 0, kind: input, shape index: {}]
  %s1 = inlined_call_operand.hbm [shape: f32[2,3,8,128], index: 1, kind: input, shape index: {}]
  %s2 = inlined_call_operand.hbm [shape: f32[2,8,128], index: 2, kind: output, shape index: {}]
  %s3 = sld [smem:[#allocation0]]
  $region45: #{tpu_custom_call.1} parent=0
    _
  %s5 = ssub.s32 1, %s3
  %s6 = scalar_select 0, %s5, %s3
  %8 = dma.hbm_to_smem %s0, 32, [#allocation3], [#allocation2]
  %9 = dma.done [#allocation2], 32
  %10 = sfence
  $region1: #{tpu_custom_call.1} parent=0
    #allocation4 [shape = 'u8[24576]{0}', space=vmem, size = 0x6000, scoped, tag = 'input window, operand 1']
    #allocation5 [shape = 's32[2]{0}', space=sflag, size = 0x8, scoped, tag = 'scoped memory for tpu_custom_call.1']
    #allocation6 [shape = 's32[2]{0}', space=sflag, size = 0x8, scoped, tag = 'scoped memory for tpu_custom_call.1']
    #allocation7 [shape = 'u8[8192]{0}', space=vmem, size = 0x2000, scoped, tag = 'output window, operand 0']
    %11 = vsyncpa [#allocation5], 0
    %s12 = scalar_lea.sflag [#allocation5], 1
    %13 = vsyncpa %s12, 0
    %14 = vsyncpa [#allocation6], 0
    %s15 = scalar_lea.sflag [#allocation6], 1
    %16 = vsyncpa %s15, 0
    loop: start=0, step=1, limit=4
    $region2: #{tpu_custom_call.1} parent=1 // loop_pre_header
      _
    $region3: #{tpu_custom_call.1} parent=1 // loop_header
      %s18 = sphi 0, %s22
      %p19 = scmp.ge.s32.totalorder %s18, 4
      %s25 = sphi 0, %s44
      %s26 = sphi 0, %s40
      %s27 = sphi 0, %s36
      %s28 = sphi 0, %s25
      %s29 = sphi 0, %s26
      %s30 = sphi 0, %s27
      %s31 = sphi 0, %s28
      %s32 = sphi 0, %s29
      %s33 = sphi 0, %s30
      %s55 = sphi 0, %s57
      %s58 = sphi 0, %s55
      %s59 = sphi 0, %s58
      %s75 = sphi 0, %s59
      %s83 = sphi 0, %s85
      %s86 = sphi 0, %s83
      %s87 = sphi 0, %s86
      %s103 = sphi 0, %s87
    $region4: #{tpu_custom_call.1} parent=1 // loop_header_branch
      %21 = sbr.rel (%p19) target = $region8
    $region5: #{tpu_custom_call.1} parent=1 // loop_body
      %s23 = ssub.s32 %s18, 1
      %s24 = ssub.s32 %s18, 2
      %s34 = sadd.s32 1, %s27
      %p35 = scmp.ge.s32.totalorder %s34, 1
      %s36 = scalar_select %p35, 0, %s34
      %s37 = sadd.s32 1, %s26
      %s38 = scalar_select %p35, %s37, %s26
      %p39 = scmp.ge.s32.totalorder %s38, 1
      %s40 = scalar_select %p39, 0, %s38
      %s41 = sadd.s32 1, %s25
      %s42 = scalar_select %p39, %s41, %s25
      %p43 = scmp.ge.s32.totalorder %s42, 2
      %s44 = scalar_select %p43, 0, %s42
      %s45 = sadd.s32 %s26, %s27
      %p46 = scmp.lt.s32.totalorder %s45, 0
      %s47 = scalar_select %p46, %s45, 0
      %s48 = sadd.s32 %s40, %s36
      %p49 = scmp.lt.s32.totalorder %s48, 0
      %s50 = scalar_select %p49, %s48, 0
      %s51 = ssub.s32 %s25, %s44
      %s52 = ssub.s32 %s47, %s50
      %s53 = sor.u32 %s51, %s52
      %p54 = scmp.eq.s32.totalorder %s53, 0
      %s56 = sadd.s32 %s55, 1
      %s57 = scalar_select %p54, %s55, %s56
      %p60 = pneg %p54
      %p61 = scmp.eq.s32.totalorder %s18, 1
      %p62 = por %p60, %p61
      %p63 = scmp.ne.s32.totalorder %s55, %s58
      %p64 = scmp.eq.s32.totalorder %s18, 0
      %p65 = por %p63, %p64
      %p66 = scmp.ne.s32.totalorder %s55, %s58
      %p67 = scmp.eq.s32.totalorder %s23, 1
      %p68 = por %p66, %p67
      %p69 = scmp.ne.s32.totalorder %s58, %s59
      %p70 = scmp.eq.s32.totalorder %s23, 0
      %p71 = por %p69, %p70
      %p72 = scmp.ne.s32.totalorder %s58, %s59
      %p73 = scmp.eq.s32.totalorder %s24, 1
      %p74 = por %p72, %p73
      %p76 = scmp.ne.s32.totalorder %s59, %s75
      %p77 = scmp.eq.s32.totalorder %s24, 0
      %p78 = por %p76, %p77
      %s79 = sadd.s32 %s25, %s26
      %s80 = sadd.s32 %s44, %s40
      %s81 = ssub.s32 %s79, %s80
      %p82 = scmp.eq.s32.totalorder %s81, 0
      %s84 = sadd.s32 %s83, 1
      %s85 = scalar_select %p82, %s83, %s84
      %p88 = pneg %p82
      %p89 = scmp.eq.s32.totalorder %s18, 1
      %p90 = por %p88, %p89
      %p91 = scmp.ne.s32.totalorder %s83, %s86
      %p92 = scmp.eq.s32.totalorder %s18, 0
      %p93 = por %p91, %p92
      %p94 = scmp.ne.s32.totalorder %s83, %s86
      %p95 = scmp.eq.s32.totalorder %s23, 1
      %p96 = por %p94, %p95
      %p97 = scmp.ne.s32.totalorder %s86, %s87
      %p98 = scmp.eq.s32.totalorder %s23, 0
      %p99 = por %p97, %p98
      %p100 = scmp.ne.s32.totalorder %s86, %s87
      %p101 = scmp.eq.s32.totalorder %s24, 1
      %p102 = por %p100, %p101
      %p104 = scmp.ne.s32.totalorder %s87, %s103
      %p105 = scmp.eq.s32.totalorder %s24, 0
      %p106 = por %p104, %p105
      %p107 = scmp.le.s32.totalorder 1, %s18
      %p108 = scmp.lt.s32.totalorder %s18, 3
      %p109 = pnand %p107, %p108
      %p110 = pneg %p109
      // Predicated region
      $region9: #{tpu_custom_call.1} parent=5 // pred_check
        _
      $region10: #{tpu_custom_call.1} parent=5 // pred_check_branch
        %112 = sbr.rel (%p109) target = $region12
      $region11: #{tpu_custom_call.1} parent=5 // pred_region
        %s113 = ssub.s32 %s18, 1
      $region12: #{tpu_custom_call.1} parent=5 // pred_fallthru
        _
      %p114 = scmp.lt.s32.totalorder %s18, 2
      // Predicated region
      $region13: #{tpu_custom_call.1} parent=5 // pred_check
        %p115 = pneg %p114
      $region14: #{tpu_custom_call.1} parent=5 // pred_check_branch
        %117 = sbr.rel (%p115) target = $region16
      $region15: #{tpu_custom_call.1} parent=5 // pred_region
        // Predicated region
        $region17: #{tpu_custom_call.1} parent=15 // pred_check
          %p118 = pneg %p65
        $region18: #{tpu_custom_call.1} parent=15 // pred_check_branch
          %120 = sbr.rel (%p118) target = $region20
        $region19: #{tpu_custom_call.1} parent=15 // pred_region
          %s121 = sand.u32 %s55, 1
          %s122 = scalar_lea.sflag [#allocation5], %s121
          %s123 = sand.u32 %s55, 1
          %s124 = smul.addr %s123, 24
          %s125 = scalar_lea.vmem [#allocation4], %s124
          %s126 = sadd.s32 %s26, %s27
          %p127 = scmp.lt.s32.totalorder %s126, 0
          %s128 = scalar_select %p127, %s126, 0
          %s130 = ssub.s32 384, 384
          %131 = vsyncadd %s122, %s130
          %s132 = smul.addr %s25, 3
          %s133 = sadd.s32 %s128, %s132
          %s134 = smul.addr %s133, 128
          %s135 = scalar_lea.hbm %s1, %s134
          %s136 = sshll.u32 %s125, 4
          %s137 = int_to_ptr.vmem [resolvable:$true] %s136
          %142 = dma.hbm_to_vmem [thread:$0]  %s135, 384, %s137, %s122, 128, 128, 8
        $region20: #{tpu_custom_call.1} parent=15 // pred_fallthru
          _
      $region16: #{tpu_custom_call.1} parent=5 // pred_fallthru
        _
      %p143 = scmp.le.s32.totalorder 1, %s18
      %p144 = scmp.lt.s32.totalorder %s18, 3
      %p145 = pnand %p143, %p144
      %p146 = pneg %p145
      // Predicated region
      $region21: #{tpu_custom_call.1} parent=5 // pred_check
        _
      $region22: #{tpu_custom_call.1} parent=5 // pred_check_branch
        %148 = sbr.rel (%p145) target = $region24
      $region23: #{tpu_custom_call.1} parent=5 // pred_region
        %s149 = ssub.s32 %s18, 1
        %s150 = sand.u32 %s58, 1
        %s151 = scalar_lea.sflag [#allocation5], %s150
        %s152 = sand.u32 %s58, 1
        %s153 = smul.addr %s152, 24
        %s154 = scalar_lea.vmem [#allocation4], %s153
        // Predicated region
        $region25: #{tpu_custom_call.1} parent=23 // pred_check
          %p155 = pneg %p71
        $region26: #{tpu_custom_call.1} parent=23 // pred_check_branch
          %157 = sbr.rel (%p155) target = $region28
        $region27: #{tpu_custom_call.1} parent=23 // pred_region
          %158 = dma.done %s151, 384
        $region28: #{tpu_custom_call.1} parent=23 // pred_fallthru
          _
        %s159 = sand.u32 %s58, 1
        %s160 = scalar_lea.sflag [#allocation5], %s159
        %s161 = sand.u32 %s58, 1
        %s162 = smul.addr %s161, 24
        %s163 = scalar_lea.vmem [#allocation4], %s162
        %p164 = pneg %p71
        %p165 = pneg %p68
        %p166 = pneg %p99
        %p167 = pneg %p96
        %s168 = sand.u32 %s86, 1
        %s169 = scalar_lea.sflag [#allocation6], %s168
        %s170 = sand.u32 %s86, 1
        %s171 = smul.addr %s170, 8
        %s172 = scalar_lea.vmem [#allocation7], %s171
        %s173 = sadd.s32 %s29, %s30
        %p174 = scmp.lt.s32.totalorder %s173, 0
        %s175 = scalar_select %p174, %s173, 0
        %s176 = sadd.s32 %s28, %s29
        %p177 = scmp.eq.s32.totalorder %s30, 0
        // Predicated region
        $region29: #{tpu_custom_call.1} parent=23 // pred_check
          %p178 = pneg %p177
        $region30: #{tpu_custom_call.1} parent=23 // pred_check_branch
          %180 = sbr.rel (%p178) target = $region32
        $region31: #{tpu_custom_call.1} parent=23 // pred_region
          %181 = vst [vmem:[%s172] sm:$0xff] 0.0
        $region32: #{tpu_custom_call.1} parent=23 // pred_fallthru
          _
        %s182 = smul.u32 %s28, 128
        %s183 = sld [smem:[#allocation3 + %s182]]
        %s184 = sadd.s32 %s182, 1
        %s185 = sld [smem:[#allocation3 + %s184]]
        %s186 = sadd.s32 %s182, 2
        %s187 = sld [smem:[#allocation3 + %s186]]
        %v188 = vld [vmem:[%s154] sm:$0xff]
        %v189 = vstv %s183
        %v190 = vsub.f32 %v188, %v189
        %s191 = scalar_lea.vmem %s154, 8 [#allocation4]
        %v192 = vld [vmem:[%s191] sm:$0xff]
        %v193 = vstv %s185
        %v194 = vsub.f32 %v192, %v193
        %s195 = scalar_lea.vmem %s154, 16 [#allocation4]
        %v196 = vld [vmem:[%s195] sm:$0xff]
        %v197 = vstv %s187
        %v198 = vsub.f32 %v196, %v197
        %v199 = vmul.f32 %v190, %v190
        %v200 = vmul.f32 %v194, %v194
        %v201 = vadd.f32 %v199, %v200
        %v202 = vmul.f32 %v198, %v198
        %v203 = vadd.f32 %v201, %v202
        %v204 = vrsqrt.pop %v203
        %v205 = vmul.f32 %v203, %v204
        %vm206 = vcmp.eq.f32.partialorder %v203, inf
        %v207 = vsel %vm206, %v203, %v205
        %vm208 = vcmp.eq.f32.partialorder %v203, 0.0
        %v209 = vand.u32 %v203, 2147483648
        %v210 = vsel %vm208, %v209, %v207
        %s211 = sadd.s32 %s29, %s30
        %v212 = vlaneseq
        %v213 = vshrl.u32 %v212, 7
        %v214 = vlaneseq
        %v215 = vand.u32 %v214, 127
        %s216 = smul.u32 %s211, 8
        %v217 = vstv %s216
        %v218 = vadd.s32 %v217, %v213
        %v219 = vmul.u32 %v218, 128
        %v220 = vadd.s32 %v219, %v215
        %vm221 = vcmp.lt.s32.totalorder %v220, 256
        %v222 = vsel %vm221, %v210, 0.0
        %v223 = vld [vmem:[%s172] sm:$0xff]
        %v224 = vadd.f32 %v222, 0.0
        %v225 = vadd.f32 %v223, %v224
        %226 = vst [vmem:[%s172] sm:$0xff] %v225
        %s227 = sand.u32 %s86, 1
        %s228 = scalar_lea.sflag [#allocation6], %s227
        %s229 = sand.u32 %s86, 1
        %s230 = smul.addr %s229, 8
        %s231 = scalar_lea.vmem [#allocation7], %s230
        // Predicated region
        $region33: #{tpu_custom_call.1} parent=23 // pred_check
          %p232 = pneg %p96
        $region34: #{tpu_custom_call.1} parent=23 // pred_check_branch
          %234 = sbr.rel (%p232) target = $region36
        $region35: #{tpu_custom_call.1} parent=23 // pred_region
          %s235 = sadd.s32 %s28, %s29
          %s237 = ssub.s32 128, 128
          %238 = vsyncadd %s228, %s237
          %s239 = smul.addr %s235, 128
          %s240 = scalar_lea.hbm %s2, %s239
          %s242 = sshll.u32 %s231, 4
          %s243 = int_to_ptr.vmem [resolvable:$true] %s242
          %245 = dma.vmem_to_hbm [thread:$0]  %s243, 128, %s240, %s228
        $region36: #{tpu_custom_call.1} parent=23 // pred_fallthru
          _
      $region24: #{tpu_custom_call.1} parent=5 // pred_fallthru
        _
      %p246 = scmp.le.s32.totalorder 2, %s18
      // Predicated region
      $region37: #{tpu_custom_call.1} parent=5 // pred_check
        %p247 = pneg %p246
      $region38: #{tpu_custom_call.1} parent=5 // pred_check_branch
        %249 = sbr.rel (%p247) target = $region40
      $region39: #{tpu_custom_call.1} parent=5 // pred_region
        %s250 = ssub.s32 %s18, 2
        // Predicated region
        $region41: #{tpu_custom_call.1} parent=39 // pred_check
          %p251 = pneg %p102
        $region42: #{tpu_custom_call.1} parent=39 // pred_check_branch
          %253 = sbr.rel (%p251) target = $region44
        $region43: #{tpu_custom_call.1} parent=39 // pred_region
          %s254 = sand.u32 %s87, 1
          %s255 = scalar_lea.sflag [#allocation6], %s254
          %s256 = sand.u32 %s87, 1
          %s257 = smul.addr %s256, 8
          %s258 = scalar_lea.vmem [#allocation7], %s257
          %259 = dma.done %s255, 128
        $region44: #{tpu_custom_call.1} parent=39 // pred_fallthru
          _
      $region40: #{tpu_custom_call.1} parent=5 // pred_fallthru
        _
    $region6: #{tpu_custom_call.1} parent=1 // loop_footer
      %s22 = sadd.s32 1, %s18
    $region7: #{tpu_custom_call.1} parent=1 // loop_footer_branch
      %17 = sbr.rel target = $region3
    $region8: #{tpu_custom_call.1} parent=1 // loop_exit
      _
    %260 = vsyncpa [#allocation5], 1
    %s261 = scalar_lea.sflag [#allocation5], 1
    %262 = vsyncpa %s261, 1
    %263 = vsyncpa [#allocation6], 1
    %s264 = scalar_lea.sflag [#allocation6], 1
    %265 = vsyncpa %s264, 1

</llo_original>
